<compile_context>
chip_gen: v7x
topology: tpu7x:2x2x1
jax: 0.10.0
libtpu: 0.0.40
codegen_flags: <defaults>
</compile_context>

<pallas_src>
import functools
import math

import jax
import jax.numpy as jnp
from jax import lax
from jax.experimental import pallas as pl
from jax.experimental.pallas import tpu as pltpu


def _gat_kernel(hq_ref, hkv_ref, mask_ref, wqs_ref, bqs_ref, wkv_ref, bkv_ref,
                out_ref, q_scr, skip_scr, m_scr, l_scr, acc_scr,
                *, heads, f_out, scale, compute_dtype):
    ki = pl.program_id(1)
    hf = heads * f_out

    # --- once per q-tile: fused [query | skip] projection + scratch init ---
    @pl.when(ki == 0)
    def _init():
        hq = hq_ref[...].astype(compute_dtype)                                  # (tq, F_in)
        qs = jnp.dot(hq, wqs_ref[...],
                     preferred_element_type=jnp.float32) + bqs_ref[...]         # (tq, 2*H*F)
        for hd in range(heads):
            lo = hd * f_out
            # fold the 1/sqrt(F_out) scale into q here (tq*F work, not tq*tk).
            q_scr[hd] = (qs[:, lo:lo + f_out] * scale).astype(compute_dtype)
            skip_scr[hd] = qs[:, hf + lo:hf + lo + f_out]
        m_scr[...] = jnp.full_like(m_scr, -jnp.inf)
        l_scr[...] = jnp.zeros_like(l_scr)
        acc_scr[...] = jnp.zeros_like(acc_scr)

    # --- per kv-tile: fused [key | value] projection ---
    hkv = hkv_ref[...].astype(compute_dtype)                                    # (tk, F_in)
    kv = jnp.dot(hkv, wkv_ref[...],
                 preferred_element_type=jnp.float32) + bkv_ref[...]             # (tk, 2*H*F)
    valid = mask_ref[...] != 0                                                  # (tq, tk) bool

    # heads is a small static constant -> unrolled loop in VMEM.
    for hd in range(heads):
        lo = hd * f_out
        k_h = kv[:, lo:lo + f_out].astype(compute_dtype)                        # (tk, F)
        v_h = kv[:, hf + lo:hf + lo + f_out].astype(compute_dtype)              # (tk, F)
        q_h = q_scr[hd]                                                         # (tq, F)

        # q @ k^T without materializing a transpose of k.
        s = lax.dot_general(q_h, k_h, (((1,), (1,)), ((), ())),
                            preferred_element_type=jnp.float32)                 # (tq, tk)
        s = jnp.where(valid, s, -9.0e15)                                        # same mask const as torch

        m_prev = m_scr[hd]                                                      # (tq, 1)
        m_new = jnp.maximum(m_prev, jnp.max(s, axis=-1, keepdims=True))
        corr = jnp.exp(m_prev - m_new)
        p = jnp.exp(s - m_new)
        l_scr[hd] = corr * l_scr[hd] + jnp.sum(p, axis=-1, keepdims=True)
        acc_scr[hd] = corr * acc_scr[hd] + jnp.dot(
            p.astype(compute_dtype), v_h, preferred_element_type=jnp.float32)
        m_scr[hd] = m_new

    # --- last kv-tile: normalize, add skip, one lane-dense store ---
    @pl.when(ki == pl.num_programs(1) - 1)
    def _finalize():
        parts = []
        for hd in range(heads):
            inv_l = pl.reciprocal(l_scr[hd], approx=True)                       # EUP, ~free
            parts.append(acc_scr[hd] * inv_l + skip_scr[hd])
        out_ref[...] = jnp.concatenate(parts, axis=-1).astype(out_ref.dtype)    # (tq, H*F)


def _pick_tile(n, target, align):
    """Largest multiple of `align` that divides n and is <= target; else full extent."""
    if n <= target:
        return n
    t = (target // align) * align
    while t >= align:
        if n % t == 0:
            return t
        t -= align
    return n


def _vmem_budget_bytes(tq, tk, f_in, heads, f_out, compute_dtype):
    cb = jnp.dtype(compute_dtype).itemsize
    hf = heads * f_out
    est = 0
    est += 2 * (tq + tk) * f_in * 4                 # double-buffered h tiles
    est += 2 * tq * tk                              # int8 mask tiles
    est += 2 * 2 * f_in * 2 * hf * cb               # fused weight tiles
    est += 2 * 2 * 2 * hf * 4                       # biases
    est += 2 * tq * hf * 4                          # output tile
    est += heads * tq * (f_out * cb + 2 * f_out * 4 + 8)   # scratch (q, skip, acc, m, l)
    est += tk * 2 * hf * 4 + 3 * tq * tk * 4        # working temps (kv proj, s/p)
    est = int(est * 2)                              # headroom for relayouts / regalloc
    # keep the explicit limit valid on every generation (v7x physical VMEM = 64 MiB)
    return max(min(est, 48 * 1024 * 1024), 16 * 1024 * 1024)


def gat_forward(h, adj, params, *, heads, out_features,
                compute_dtype=jnp.bfloat16, q_tile=256, kv_tile=512):
    """Returns (N, heads, out_features), matching the PyTorch concat=True output."""
    N, f_in = h.shape
    hf = heads * out_features
    wq, bq, wk, bk, wv, bv, ws, bs = params

    # Fuse projections: [query | skip] uses q-tile rows, [key | value] uses kv-tile rows.
    w_qs = jnp.concatenate([wq, ws], axis=1).astype(compute_dtype)      # (F_in, 2*H*F)
    b_qs = jnp.concatenate([bq, bs])[None, :].astype(jnp.float32)       # (1,    2*H*F)
    w_kv = jnp.concatenate([wk, wv], axis=1).astype(compute_dtype)
    b_kv = jnp.concatenate([bk, bv])[None, :].astype(jnp.float32)

    mask = (adj > 0).astype(jnp.int8)                                   # 4x smaller than f32 adj

    tq = _pick_tile(N, q_tile, 32)      # 32: int8 sublane packing
    tk = _pick_tile(N, kv_tile, 128)    # 128: lane-aligned mask tiles
    nq, nk = N // tq, N // tk
    scale = 1.0 / math.sqrt(out_features)

    kernel = functools.partial(_gat_kernel, heads=heads, f_out=out_features,
                               scale=scale, compute_dtype=compute_dtype)

    out_flat = pl.pallas_call(
        kernel,
        out_shape=jax.ShapeDtypeStruct((N, hf), jnp.float32),
        grid_spec=pltpu.PrefetchScalarGridSpec(
            num_scalar_prefetch=0,
            grid=(nq, nk),
            in_specs=[
                pl.BlockSpec((tq, f_in), lambda qi, ki: (qi, 0)),       # h rows for q/skip
                pl.BlockSpec((tk, f_in), lambda qi, ki: (ki, 0)),       # h rows for k/v
                pl.BlockSpec((tq, tk), lambda qi, ki: (qi, ki)),        # int8 adjacency mask
                pl.BlockSpec((f_in, 2 * hf), lambda qi, ki: (0, 0)),    # W_[q|skip]
                pl.BlockSpec((1, 2 * hf), lambda qi, ki: (0, 0)),       # b_[q|skip]
                pl.BlockSpec((f_in, 2 * hf), lambda qi, ki: (0, 0)),    # W_[k|v]
                pl.BlockSpec((1, 2 * hf), lambda qi, ki: (0, 0)),       # b_[k|v]
            ],
            out_specs=pl.BlockSpec((tq, hf), lambda qi, ki: (qi, 0)),   # lane-dense output
            scratch_shapes=[
                pltpu.VMEM((heads, tq, out_features), compute_dtype),   # scaled q
                pltpu.VMEM((heads, tq, out_features), jnp.float32),     # skip
                pltpu.VMEM((heads, tq, 1), jnp.float32),                # running max m
                pltpu.VMEM((heads, tq, 1), jnp.float32),                # running sum l
                pltpu.VMEM((heads, tq, out_features), jnp.float32),     # acc
            ],
        ),
        compiler_params=pltpu.CompilerParams(
            dimension_semantics=("parallel", "arbitrary"),
            vmem_limit_bytes=_vmem_budget_bytes(tq, tk, f_in, heads,
                                                out_features, compute_dtype),
        ),
    )(h, h, mask, w_qs, b_qs, w_kv, b_kv)

    # (N, H*F) -> (N, H, F) is a free reshape (row-major layout already matches).
    return out_flat.reshape(N, heads, out_features)


def init_params(key, in_features, out_features, heads):
    """nn.Linear-style deterministic init: U(-1/sqrt(in), 1/sqrt(in)); y = x @ W + b."""
    bound = 1.0 / math.sqrt(in_features)
    keys = jax.random.split(key, 8)

    def lin(kw, kb):
        w = jax.random.uniform(kw, (in_features, heads * out_features),
                               minval=-bound, maxval=bound, dtype=jnp.float32)
        b = jax.random.uniform(kb, (heads * out_features,),
                               minval=-bound, maxval=bound, dtype=jnp.float32)
        return w, b

    wq, bq = lin(keys[0], keys[1])
    wk, bk = lin(keys[2], keys[3])
    wv, bv = lin(keys[4], keys[5])
    ws, bs = lin(keys[6], keys[7])
    return wq, bq, wk, bk, wv, bv, ws, bs


def gat_reference(h, adj, params, *, heads, out_features):
    """Pure-JAX reference mirroring the PyTorch forward (concat=True, eval mode)."""
    wq, bq, wk, bk, wv, bv, ws, bs = params

    def proj(w, b):
        y = h @ w + b                                                  # (N, H*F)
        return jnp.transpose(y.reshape(-1, heads, out_features), (1, 0, 2))  # (H, N, F)

    q, k, v = proj(wq, bq), proj(wk, bk), proj(wv, bv)
    alpha = jnp.einsum('hnf,hmf->hnm', q, k) / math.sqrt(out_features)
    att = jnp.where(adj[None] > 0, alpha, -9.0e15)
    att = jax.nn.softmax(att, axis=-1)
    out = jnp.einsum('hnm,hmf->hnf', att, v)                           # (H, N, F)
    out = jnp.transpose(out, (1, 0, 2))                                # (N, H, F)
    skip = (h @ ws + bs).reshape(-1, heads, out_features)
    return out + skip


def _make_inputs(key, n, f_in, density=0.5):
    k_h, k_adj = jax.random.split(key)
    h = jax.random.normal(k_h, (n, f_in), dtype=jnp.float32)
    adj = (jax.random.uniform(k_adj, (n, n)) > (1.0 - density)).astype(jnp.float32)
    adj = jnp.maximum(adj, jnp.eye(n, dtype=jnp.float32))              # self loops
    return h, adj


if __name__ == "__main__":
    IN_FEATURES, OUT_FEATURES, HEADS = 8, 32, 2

    key = jax.random.PRNGKey(0)
    k_small, k_big, k_p = jax.random.split(key, 3)
    params = init_params(k_p, IN_FEATURES, OUT_FEATURES, HEADS)

    # 1) small graph (single tile), f32 compute, tight-ish tolerance.
    h, adj = _make_inputs(k_small, 16, IN_FEATURES)
    ref = gat_reference(h, adj, params, heads=HEADS, out_features=OUT_FEATURES)

    out_f32 = gat_forward(h, adj, params, heads=HEADS, out_features=OUT_FEATURES,
                          compute_dtype=jnp.float32)
    out_f32 = jax.block_until_ready(out_f32)
    assert out_f32.shape == (16, HEADS, OUT_FEATURES), out_f32.shape
    assert jnp.allclose(out_f32, ref, atol=5e-3, rtol=5e-3), \
        float(jnp.max(jnp.abs(out_f32 - ref)))

    # 2) same graph, bf16 MXU operands (f32 accumulation), looser tolerance.
    out_bf16 = gat_forward(h, adj, params, heads=HEADS, out_features=OUT_FEATURES,
                           compute_dtype=jnp.bfloat16)
    out_bf16 = jax.block_until_ready(out_bf16)
    assert jnp.allclose(out_bf16, ref, atol=5e-2, rtol=5e-2), \
        float(jnp.max(jnp.abs(out_bf16 - ref)))

    # 3) larger graph exercising the tiled online-softmax path (grid = 3 x 3).
    h_big, adj_big = _make_inputs(k_big, 384, IN_FEATURES, density=0.3)
    ref_big = gat_reference(h_big, adj_big, params, heads=HEADS, out_features=OUT_FEATURES)
    out_big = gat_forward(h_big, adj_big, params, heads=HEADS, out_features=OUT_FEATURES,
                          compute_dtype=jnp.float32, q_tile=128, kv_tile=128)
    out_big = jax.block_until_ready(out_big)
    assert out_big.shape == (384, HEADS, OUT_FEATURES), out_big.shape
    assert jnp.allclose(out_big, ref_big, atol=5e-3, rtol=5e-3), \
        float(jnp.max(jnp.abs(out_big - ref_big)))

    print("KERNEL_OK")
</pallas_src>

<mosaic_0001>
module attributes {stable_mosaic.version = 11 : i64} {
  func.func @_gat_kernel(%arg0: i32, %arg1: i32, %arg2: memref<16x8xf32, #tpu.memory_space<vmem>>, %arg3: memref<16x8xf32, #tpu.memory_space<vmem>>, %arg4: memref<16x16xi8, #tpu.memory_space<vmem>>, %arg5: memref<8x128xf32, #tpu.memory_space<vmem>>, %arg6: memref<1x128xf32, #tpu.memory_space<vmem>>, %arg7: memref<8x128xf32, #tpu.memory_space<vmem>>, %arg8: memref<1x128xf32, #tpu.memory_space<vmem>>, %arg9: memref<16x64xf32, #tpu.memory_space<vmem>>, %arg10: memref<2x16x32xf32, #tpu.memory_space<vmem>>, %arg11: memref<2x16x32xf32, #tpu.memory_space<vmem>>, %arg12: memref<2x16x1xf32, #tpu.memory_space<vmem>>, %arg13: memref<2x16x1xf32, #tpu.memory_space<vmem>>, %arg14: memref<2x16x32xf32, #tpu.memory_space<vmem>>) attributes {dimension_semantics = [#tpu.dimension_semantics<parallel>, #tpu.dimension_semantics<arbitrary>], iteration_bounds = array<i64: 1, 1>, scalar_prefetch = 0 : i64, scratch_operands = 5 : i64, tpu.core_type = #tpu.core_type<tc>, window_params = [{transform_indices = @transform_0, window_bounds = array<i64: 16, 8>}, {transform_indices = @transform_1, window_bounds = array<i64: 16, 8>}, {transform_indices = @transform_2, window_bounds = array<i64: 16, 16>}, {pipeline_mode = #tpu.pipeline_mode<synchronous>, transform_indices = @transform_3, window_bounds = array<i64: 8, 128>}, {pipeline_mode = #tpu.pipeline_mode<synchronous>, transform_indices = @transform_4, window_bounds = array<i64: 1, 128>}, {pipeline_mode = #tpu.pipeline_mode<synchronous>, transform_indices = @transform_5, window_bounds = array<i64: 8, 128>}, {pipeline_mode = #tpu.pipeline_mode<synchronous>, transform_indices = @transform_6, window_bounds = array<i64: 1, 128>}, {transform_indices = @transform_7, window_bounds = array<i64: 16, 64>}]} {
    %c0_i32 = arith.constant 0 : i32
    %0 = arith.cmpi eq, %arg1, %c0_i32 : i32
    %1 = arith.extui %0 : i1 to i32
    %c0_i32_0 = arith.constant 0 : i32
    %2 = arith.cmpi ne, %1, %c0_i32_0 : i32
    scf.if %2 {
      %c0_61 = arith.constant 0 : index
      %c0_62 = arith.constant 0 : index
      %91 = vector.load %arg2[%c0_61, %c0_62] : memref<16x8xf32, #tpu.memory_space<vmem>>, vector<16x8xf32>
      %c0_63 = arith.constant 0 : index
      %c0_64 = arith.constant 0 : index
      %92 = vector.load %arg5[%c0_63, %c0_64] : memref<8x128xf32, #tpu.memory_space<vmem>>, vector<8x128xf32>
      %cst_65 = arith.constant dense<0.000000e+00> : vector<16x128xf32>
      %93 = tpu.matmul %91, %92, %cst_65 {dimension_numbers = #tpu.dot_dimension_numbers<[1], [0], [0], [1], [0, 0, 1, 1], [], []>} : vector<16x8xf32>, vector<8x128xf32>, vector<16x128xf32> -> vector<16x128xf32>
      %c0_66 = arith.constant 0 : index
      %c0_67 = arith.constant 0 : index
      %94 = vector.load %arg6[%c0_66, %c0_67] : memref<1x128xf32, #tpu.memory_space<vmem>>, vector<1x128xf32>
      %95 = vector.broadcast %94 : vector<1x128xf32> to vector<16x128xf32>
      %96 = arith.addf %93, %95 : vector<16x128xf32>
      %97 = vector.extract_strided_slice %96 {offsets = [0, 0], sizes = [16, 32], strides = [1, 1]} : vector<16x128xf32> to vector<16x32xf32>
      %cst_68 = arith.constant 0.176776692 : f32
      %98 = vector.broadcast %cst_68 : f32 to vector<16x32xf32>
      %99 = arith.mulf %97, %98 : vector<16x32xf32>
      %c0_69 = arith.constant 0 : index
      %c0_70 = arith.constant 0 : index
      %c0_71 = arith.constant 0 : index
      %100 = vector.load %arg10[%c0_69, %c0_70, %c0_71] : memref<2x16x32xf32, #tpu.memory_space<vmem>>, vector<1x16x32xf32>
      %101 = vector.shape_cast %100 : vector<1x16x32xf32> to vector<16x32xf32>
      %102 = vector.shape_cast %99 : vector<16x32xf32> to vector<1x16x32xf32>
      tpu.vector_store %arg10[%c0_69, %c0_70, %c0_71], %102 {strides = array<i32>} : memref<2x16x32xf32, #tpu.memory_space<vmem>>, vector<1x16x32xf32>,
      %103 = vector.extract_strided_slice %96 {offsets = [0, 64], sizes = [16, 32], strides = [1, 1]} : vector<16x128xf32> to vector<16x32xf32>
      %c0_72 = arith.constant 0 : index
      %c0_73 = arith.constant 0 : index
      %c0_74 = arith.constant 0 : index
      %104 = vector.load %arg11[%c0_72, %c0_73, %c0_74] : memref<2x16x32xf32, #tpu.memory_space<vmem>>, vector<1x16x32xf32>
      %105 = vector.shape_cast %104 : vector<1x16x32xf32> to vector<16x32xf32>
      %106 = vector.shape_cast %103 : vector<16x32xf32> to vector<1x16x32xf32>
      tpu.vector_store %arg11[%c0_72, %c0_73, %c0_74], %106 {strides = array<i32>} : memref<2x16x32xf32, #tpu.memory_space<vmem>>, vector<1x16x32xf32>,
      %107 = vector.extract_strided_slice %96 {offsets = [0, 32], sizes = [16, 32], strides = [1, 1]} : vector<16x128xf32> to vector<16x32xf32>
      %cst_75 = arith.constant 0.176776692 : f32
      %108 = vector.broadcast %cst_75 : f32 to vector<16x32xf32>
      %109 = arith.mulf %107, %108 : vector<16x32xf32>
      %c1_76 = arith.constant 1 : index
      %c0_77 = arith.constant 0 : index
      %c0_78 = arith.constant 0 : index
      %110 = vector.load %arg10[%c1_76, %c0_77, %c0_78] : memref<2x16x32xf32, #tpu.memory_space<vmem>>, vector<1x16x32xf32>
      %111 = vector.shape_cast %110 : vector<1x16x32xf32> to vector<16x32xf32>
      %112 = vector.shape_cast %109 : vector<16x32xf32> to vector<1x16x32xf32>
      tpu.vector_store %arg10[%c1_76, %c0_77, %c0_78], %112 {strides = array<i32>} : memref<2x16x32xf32, #tpu.memory_space<vmem>>, vector<1x16x32xf32>,
      %113 = vector.extract_strided_slice %96 {offsets = [0, 96], sizes = [16, 32], strides = [1, 1]} : vector<16x128xf32> to vector<16x32xf32>
      %c1_79 = arith.constant 1 : index
      %c0_80 = arith.constant 0 : index
      %c0_81 = arith.constant 0 : index
      %114 = vector.load %arg11[%c1_79, %c0_80, %c0_81] : memref<2x16x32xf32, #tpu.memory_space<vmem>>, vector<1x16x32xf32>
      %115 = vector.shape_cast %114 : vector<1x16x32xf32> to vector<16x32xf32>
      %116 = vector.shape_cast %113 : vector<16x32xf32> to vector<1x16x32xf32>
      tpu.vector_store %arg11[%c1_79, %c0_80, %c0_81], %116 {strides = array<i32>} : memref<2x16x32xf32, #tpu.memory_space<vmem>>, vector<1x16x32xf32>,
      %cst_82 = arith.constant 0xFF800000 : f32
      %117 = vector.broadcast %cst_82 : f32 to vector<2x16x1xf32>
      %c0_83 = arith.constant 0 : index
      %c0_84 = arith.constant 0 : index
      %c0_85 = arith.constant 0 : index
      %118 = vector.load %arg12[%c0_83, %c0_84, %c0_85] : memref<2x16x1xf32, #tpu.memory_space<vmem>>, vector<2x16x1xf32>
      tpu.vector_store %arg12[%c0_83, %c0_84, %c0_85], %117 {strides = array<i32>} : memref<2x16x1xf32, #tpu.memory_space<vmem>>, vector<2x16x1xf32>,
      %cst_86 = arith.constant 0.000000e+00 : f32
      %119 = vector.broadcast %cst_86 : f32 to vector<2x16x1xf32>
      %c0_87 = arith.constant 0 : index
      %c0_88 = arith.constant 0 : index
      %c0_89 = arith.constant 0 : index
      %120 = vector.load %arg13[%c0_87, %c0_88, %c0_89] : memref<2x16x1xf32, #tpu.memory_space<vmem>>, vector<2x16x1xf32>
      tpu.vector_store %arg13[%c0_87, %c0_88, %c0_89], %119 {strides = array<i32>} : memref<2x16x1xf32, #tpu.memory_space<vmem>>, vector<2x16x1xf32>,
      %cst_90 = arith.constant 0.000000e+00 : f32
      %121 = vector.broadcast %cst_90 : f32 to vector<2x16x32xf32>
      %c0_91 = arith.constant 0 : index
      %c0_92 = arith.constant 0 : index
      %c0_93 = arith.constant 0 : index
      %122 = vector.load %arg14[%c0_91, %c0_92, %c0_93] : memref<2x16x32xf32, #tpu.memory_space<vmem>>, vector<2x16x32xf32>
      tpu.vector_store %arg14[%c0_91, %c0_92, %c0_93], %121 {strides = array<i32>} : memref<2x16x32xf32, #tpu.memory_space<vmem>>, vector<2x16x32xf32>,
    } else {
    }
    %c0 = arith.constant 0 : index
    %c0_1 = arith.constant 0 : index
    %3 = vector.load %arg3[%c0, %c0_1] : memref<16x8xf32, #tpu.memory_space<vmem>>, vector<16x8xf32>
    %c0_2 = arith.constant 0 : index
    %c0_3 = arith.constant 0 : index
    %4 = vector.load %arg7[%c0_2, %c0_3] : memref<8x128xf32, #tpu.memory_space<vmem>>, vector<8x128xf32>
    %cst = arith.constant dense<0.000000e+00> : vector<16x128xf32>
    %5 = tpu.matmul %3, %4, %cst {dimension_numbers = #tpu.dot_dimension_numbers<[1], [0], [0], [1], [0, 0, 1, 1], [], []>} : vector<16x8xf32>, vector<8x128xf32>, vector<16x128xf32> -> vector<16x128xf32>
    %c0_4 = arith.constant 0 : index
    %c0_5 = arith.constant 0 : index
    %6 = vector.load %arg8[%c0_4, %c0_5] : memref<1x128xf32, #tpu.memory_space<vmem>>, vector<1x128xf32>
    %7 = vector.broadcast %6 : vector<1x128xf32> to vector<16x128xf32>
    %8 = arith.addf %5, %7 : vector<16x128xf32>
    %c0_6 = arith.constant 0 : index
    %c0_7 = arith.constant 0 : index
    %9 = vector.load %arg4[%c0_6, %c0_7] : memref<16x16xi8, #tpu.memory_space<vmem>>, vector<16x16xi8>
    %c0_i8 = arith.constant 0 : i8
    %10 = vector.broadcast %c0_i8 : i8 to vector<16x16xi8>
    %11 = arith.cmpi ne, %9, %10 : vector<16x16xi8>
    %12 = vector.extract_strided_slice %8 {offsets = [0, 0], sizes = [16, 32], strides = [1, 1]} : vector<16x128xf32> to vector<16x32xf32>
    %13 = vector.extract_strided_slice %8 {offsets = [0, 64], sizes = [16, 32], strides = [1, 1]} : vector<16x128xf32> to vector<16x32xf32>
    %c0_8 = arith.constant 0 : index
    %c0_9 = arith.constant 0 : index
    %c0_10 = arith.constant 0 : index
    %14 = vector.load %arg10[%c0_8, %c0_9, %c0_10] : memref<2x16x32xf32, #tpu.memory_space<vmem>>, vector<1x16x32xf32>
    %15 = vector.shape_cast %14 : vector<1x16x32xf32> to vector<16x32xf32>
    %cst_11 = arith.constant dense<0.000000e+00> : vector<16x16xf32>
    %16 = tpu.matmul %15, %12, %cst_11 {dimension_numbers = #tpu.dot_dimension_numbers<[1], [1], [0], [0], [0, 0, 1, 0], [], []>} : vector<16x32xf32>, vector<16x32xf32>, vector<16x16xf32> -> vector<16x16xf32>
    %cst_12 = arith.constant -9.000000e+15 : f32
    %17 = vector.broadcast %cst_12 : f32 to vector<16x16xf32>
    %18 = arith.select %11, %16, %17 : vector<16x16xi1>, vector<16x16xf32>
    %c0_13 = arith.constant 0 : index
    %c0_14 = arith.constant 0 : index
    %c0_15 = arith.constant 0 : index
    %19 = vector.load %arg12[%c0_13, %c0_14, %c0_15] : memref<2x16x1xf32, #tpu.memory_space<vmem>>, vector<1x16x1xf32>
    %20 = vector.shape_cast %19 : vector<1x16x1xf32> to vector<16x1xf32>
    %cst_16 = arith.constant dense<0xFF800000> : vector<16xf32>
    %21 = vector.multi_reduction <maximumf>, %18, %cst_16 [1] : vector<16x16xf32> to vector<16xf32>
    %22 = vector.shape_cast %21 : vector<16xf32> to vector<16x1xf32>
    %23 = arith.maximumf %20, %22 : vector<16x1xf32>
    %24 = arith.subf %20, %23 : vector<16x1xf32>
    %25 = math.exp %24 : vector<16x1xf32>
    %26 = vector.broadcast %23 : vector<16x1xf32> to vector<16x16xf32>
    %27 = arith.subf %18, %26 : vector<16x16xf32>
    %28 = math.exp %27 : vector<16x16xf32>
    %c0_17 = arith.constant 0 : index
    %c0_18 = arith.constant 0 : index
    %c0_19 = arith.constant 0 : index
    %29 = vector.load %arg13[%c0_17, %c0_18, %c0_19] : memref<2x16x1xf32, #tpu.memory_space<vmem>>, vector<1x16x1xf32>
    %30 = vector.shape_cast %29 : vector<1x16x1xf32> to vector<16x1xf32>
    %31 = arith.mulf %25, %30 : vector<16x1xf32>
    %cst_20 = arith.constant dense<0.000000e+00> : vector<16xf32>
    %32 = vector.multi_reduction <add>, %28, %cst_20 [1] : vector<16x16xf32> to vector<16xf32>
    %33 = vector.shape_cast %32 : vector<16xf32> to vector<16x1xf32>
    %34 = arith.addf %31, %33 : vector<16x1xf32>
    %c0_21 = arith.constant 0 : index
    %c0_22 = arith.constant 0 : index
    %c0_23 = arith.constant 0 : index
    %35 = vector.load %arg13[%c0_21, %c0_22, %c0_23] : memref<2x16x1xf32, #tpu.memory_space<vmem>>, vector<1x16x1xf32>
    %36 = vector.shape_cast %35 : vector<1x16x1xf32> to vector<16x1xf32>
    %37 = vector.shape_cast %34 : vector<16x1xf32> to vector<1x16x1xf32>
    tpu.vector_store %arg13[%c0_21, %c0_22, %c0_23], %37 {strides = array<i32>} : memref<2x16x1xf32, #tpu.memory_space<vmem>>, vector<1x16x1xf32>,
    %c0_24 = arith.constant 0 : index
    %c0_25 = arith.constant 0 : index
    %c0_26 = arith.constant 0 : index
    %38 = vector.load %arg14[%c0_24, %c0_25, %c0_26] : memref<2x16x32xf32, #tpu.memory_space<vmem>>, vector<1x16x32xf32>
    %39 = vector.shape_cast %38 : vector<1x16x32xf32> to vector<16x32xf32>
    %40 = vector.broadcast %25 : vector<16x1xf32> to vector<16x32xf32>
    %41 = arith.mulf %40, %39 : vector<16x32xf32>
    %cst_27 = arith.constant dense<0.000000e+00> : vector<16x32xf32>
    %42 = tpu.matmul %28, %13, %cst_27 {dimension_numbers = #tpu.dot_dimension_numbers<[1], [0], [0], [1], [0, 0, 1, 1], [], []>} : vector<16x16xf32>, vector<16x32xf32>, vector<16x32xf32> -> vector<16x32xf32>
    %43 = arith.addf %41, %42 : vector<16x32xf32>
    %c0_28 = arith.constant 0 : index
    %c0_29 = arith.constant 0 : index
    %c0_30 = arith.constant 0 : index
    %44 = vector.load %arg14[%c0_28, %c0_29, %c0_30] : memref<2x16x32xf32, #tpu.memory_space<vmem>>, vector<1x16x32xf32>
    %45 = vector.shape_cast %44 : vector<1x16x32xf32> to vector<16x32xf32>
    %46 = vector.shape_cast %43 : vector<16x32xf32> to vector<1x16x32xf32>
    tpu.vector_store %arg14[%c0_28, %c0_29, %c0_30], %46 {strides = array<i32>} : memref<2x16x32xf32, #tpu.memory_space<vmem>>, vector<1x16x32xf32>,
    %c0_31 = arith.constant 0 : index
    %c0_32 = arith.constant 0 : index
    %c0_33 = arith.constant 0 : index
    %47 = vector.load %arg12[%c0_31, %c0_32, %c0_33] : memref<2x16x1xf32, #tpu.memory_space<vmem>>, vector<1x16x1xf32>
    %48 = vector.shape_cast %47 : vector<1x16x1xf32> to vector<16x1xf32>
    %49 = vector.shape_cast %23 : vector<16x1xf32> to vector<1x16x1xf32>
    tpu.vector_store %arg12[%c0_31, %c0_32, %c0_33], %49 {strides = array<i32>} : memref<2x16x1xf32, #tpu.memory_space<vmem>>, vector<1x16x1xf32>,
    %50 = vector.extract_strided_slice %8 {offsets = [0, 32], sizes = [16, 32], strides = [1, 1]} : vector<16x128xf32> to vector<16x32xf32>
    %51 = vector.extract_strided_slice %8 {offsets = [0, 96], sizes = [16, 32], strides = [1, 1]} : vector<16x128xf32> to vector<16x32xf32>
    %c1 = arith.constant 1 : index
    %c0_34 = arith.constant 0 : index
    %c0_35 = arith.constant 0 : index
    %52 = vector.load %arg10[%c1, %c0_34, %c0_35] : memref<2x16x32xf32, #tpu.memory_space<vmem>>, vector<1x16x32xf32>
    %53 = vector.shape_cast %52 : vector<1x16x32xf32> to vector<16x32xf32>
    %cst_36 = arith.constant dense<0.000000e+00> : vector<16x16xf32>
    %54 = tpu.matmul %53, %50, %cst_36 {dimension_numbers = #tpu.dot_dimension_numbers<[1], [1], [0], [0], [0, 0, 1, 0], [], []>} : vector<16x32xf32>, vector<16x32xf32>, vector<16x16xf32> -> vector<16x16xf32>
    %cst_37 = arith.constant -9.000000e+15 : f32
    %55 = vector.broadcast %cst_37 : f32 to vector<16x16xf32>
    %56 = arith.select %11, %54, %55 : vector<16x16xi1>, vector<16x16xf32>
    %c1_38 = arith.constant 1 : index
    %c0_39 = arith.constant 0 : index
    %c0_40 = arith.constant 0 : index
    %57 = vector.load %arg12[%c1_38, %c0_39, %c0_40] : memref<2x16x1xf32, #tpu.memory_space<vmem>>, vector<1x16x1xf32>
    %58 = vector.shape_cast %57 : vector<1x16x1xf32> to vector<16x1xf32>
    %cst_41 = arith.constant dense<0xFF800000> : vector<16xf32>
    %59 = vector.multi_reduction <maximumf>, %56, %cst_41 [1] : vector<16x16xf32> to vector<16xf32>
    %60 = vector.shape_cast %59 : vector<16xf32> to vector<16x1xf32>
    %61 = arith.maximumf %58, %60 : vector<16x1xf32>
    %62 = arith.subf %58, %61 : vector<16x1xf32>
    %63 = math.exp %62 : vector<16x1xf32>
    %64 = vector.broadcast %61 : vector<16x1xf32> to vector<16x16xf32>
    %65 = arith.subf %56, %64 : vector<16x16xf32>
    %66 = math.exp %65 : vector<16x16xf32>
    %c1_42 = arith.constant 1 : index
    %c0_43 = arith.constant 0 : index
    %c0_44 = arith.constant 0 : index
    %67 = vector.load %arg13[%c1_42, %c0_43, %c0_44] : memref<2x16x1xf32, #tpu.memory_space<vmem>>, vector<1x16x1xf32>
    %68 = vector.shape_cast %67 : vector<1x16x1xf32> to vector<16x1xf32>
    %69 = arith.mulf %63, %68 : vector<16x1xf32>
    %cst_45 = arith.constant dense<0.000000e+00> : vector<16xf32>
    %70 = vector.multi_reduction <add>, %66, %cst_45 [1] : vector<16x16xf32> to vector<16xf32>
    %71 = vector.shape_cast %70 : vector<16xf32> to vector<16x1xf32>
    %72 = arith.addf %69, %71 : vector<16x1xf32>
    %c1_46 = arith.constant 1 : index
    %c0_47 = arith.constant 0 : index
    %c0_48 = arith.constant 0 : index
    %73 = vector.load %arg13[%c1_46, %c0_47, %c0_48] : memref<2x16x1xf32, #tpu.memory_space<vmem>>, vector<1x16x1xf32>
    %74 = vector.shape_cast %73 : vector<1x16x1xf32> to vector<16x1xf32>
    %75 = vector.shape_cast %72 : vector<16x1xf32> to vector<1x16x1xf32>
    tpu.vector_store %arg13[%c1_46, %c0_47, %c0_48], %75 {strides = array<i32>} : memref<2x16x1xf32, #tpu.memory_space<vmem>>, vector<1x16x1xf32>,
    %c1_49 = arith.constant 1 : index
    %c0_50 = arith.constant 0 : index
    %c0_51 = arith.constant 0 : index
    %76 = vector.load %arg14[%c1_49, %c0_50, %c0_51] : memref<2x16x32xf32, #tpu.memory_space<vmem>>, vector<1x16x32xf32>
    %77 = vector.shape_cast %76 : vector<1x16x32xf32> to vector<16x32xf32>
    %78 = vector.broadcast %63 : vector<16x1xf32> to vector<16x32xf32>
    %79 = arith.mulf %78, %77 : vector<16x32xf32>
    %cst_52 = arith.constant dense<0.000000e+00> : vector<16x32xf32>
    %80 = tpu.matmul %66, %51, %cst_52 {dimension_numbers = #tpu.dot_dimension_numbers<[1], [0], [0], [1], [0, 0, 1, 1], [], []>} : vector<16x16xf32>, vector<16x32xf32>, vector<16x32xf32> -> vector<16x32xf32>
    %81 = arith.addf %79, %80 : vector<16x32xf32>
    %c1_53 = arith.constant 1 : index
    %c0_54 = arith.constant 0 : index
    %c0_55 = arith.constant 0 : index
    %82 = vector.load %arg14[%c1_53, %c0_54, %c0_55] : memref<2x16x32xf32, #tpu.memory_space<vmem>>, vector<1x16x32xf32>
    %83 = vector.shape_cast %82 : vector<1x16x32xf32> to vector<16x32xf32>
    %84 = vector.shape_cast %81 : vector<16x32xf32> to vector<1x16x32xf32>
    tpu.vector_store %arg14[%c1_53, %c0_54, %c0_55], %84 {strides = array<i32>} : memref<2x16x32xf32, #tpu.memory_space<vmem>>, vector<1x16x32xf32>,
    %c1_56 = arith.constant 1 : index
    %c0_57 = arith.constant 0 : index
    %c0_58 = arith.constant 0 : index
    %85 = vector.load %arg12[%c1_56, %c0_57, %c0_58] : memref<2x16x1xf32, #tpu.memory_space<vmem>>, vector<1x16x1xf32>
    %86 = vector.shape_cast %85 : vector<1x16x1xf32> to vector<16x1xf32>
    %87 = vector.shape_cast %61 : vector<16x1xf32> to vector<1x16x1xf32>
    tpu.vector_store %arg12[%c1_56, %c0_57, %c0_58], %87 {strides = array<i32>} : memref<2x16x1xf32, #tpu.memory_space<vmem>>, vector<1x16x1xf32>,
    %c0_i32_59 = arith.constant 0 : i32
    %88 = arith.cmpi eq, %arg1, %c0_i32_59 : i32
    %89 = arith.extui %88 : i1 to i32
    %c0_i32_60 = arith.constant 0 : i32
    %90 = arith.cmpi ne, %89, %c0_i32_60 : i32
    scf.if %90 {
      %c0_61 = arith.constant 0 : index
      %c0_62 = arith.constant 0 : index
      %c0_63 = arith.constant 0 : index
      %91 = vector.load %arg13[%c0_61, %c0_62, %c0_63] : memref<2x16x1xf32, #tpu.memory_space<vmem>>, vector<1x16x1xf32>
      %92 = vector.shape_cast %91 : vector<1x16x1xf32> to vector<16x1xf32>
      %93 = tpu.reciprocal %92 {approx = true} : vector<16x1xf32> -> vector<16x1xf32>
      %c0_64 = arith.constant 0 : index
      %c0_65 = arith.constant 0 : index
      %c0_66 = arith.constant 0 : index
      %94 = vector.load %arg14[%c0_64, %c0_65, %c0_66] : memref<2x16x32xf32, #tpu.memory_space<vmem>>, vector<1x16x32xf32>
      %95 = vector.shape_cast %94 : vector<1x16x32xf32> to vector<16x32xf32>
      %96 = vector.broadcast %93 : vector<16x1xf32> to vector<16x32xf32>
      %97 = arith.mulf %95, %96 : vector<16x32xf32>
      %c0_67 = arith.constant 0 : index
      %c0_68 = arith.constant 0 : index
      %c0_69 = arith.constant 0 : index
      %98 = vector.load %arg11[%c0_67, %c0_68, %c0_69] : memref<2x16x32xf32, #tpu.memory_space<vmem>>, vector<1x16x32xf32>
      %99 = vector.shape_cast %98 : vector<1x16x32xf32> to vector<16x32xf32>
      %100 = arith.addf %97, %99 : vector<16x32xf32>
      %c1_70 = arith.constant 1 : index
      %c0_71 = arith.constant 0 : index
      %c0_72 = arith.constant 0 : index
      %101 = vector.load %arg13[%c1_70, %c0_71, %c0_72] : memref<2x16x1xf32, #tpu.memory_space<vmem>>, vector<1x16x1xf32>
      %102 = vector.shape_cast %101 : vector<1x16x1xf32> to vector<16x1xf32>
      %103 = tpu.reciprocal %102 {approx = true} : vector<16x1xf32> -> vector<16x1xf32>
      %c1_73 = arith.constant 1 : index
      %c0_74 = arith.constant 0 : index
      %c0_75 = arith.constant 0 : index
      %104 = vector.load %arg14[%c1_73, %c0_74, %c0_75] : memref<2x16x32xf32, #tpu.memory_space<vmem>>, vector<1x16x32xf32>
      %105 = vector.shape_cast %104 : vector<1x16x32xf32> to vector<16x32xf32>
      %106 = vector.broadcast %103 : vector<16x1xf32> to vector<16x32xf32>
      %107 = arith.mulf %105, %106 : vector<16x32xf32>
      %c1_76 = arith.constant 1 : index
      %c0_77 = arith.constant 0 : index
      %c0_78 = arith.constant 0 : index
      %108 = vector.load %arg11[%c1_76, %c0_77, %c0_78] : memref<2x16x32xf32, #tpu.memory_space<vmem>>, vector<1x16x32xf32>
      %109 = vector.shape_cast %108 : vector<1x16x32xf32> to vector<16x32xf32>
      %110 = arith.addf %107, %109 : vector<16x32xf32>
      %111 = tpu.concatenate %100, %110 in 1 : vector<16x32xf32>, vector<16x32xf32> -> vector<16x64xf32>
      %c0_79 = arith.constant 0 : index
      %c0_80 = arith.constant 0 : index
      %112 = vector.load %arg9[%c0_79, %c0_80] : memref<16x64xf32, #tpu.memory_space<vmem>>, vector<16x64xf32>
      tpu.vector_store %arg9[%c0_79, %c0_80], %111 {strides = array<i32>} : memref<16x64xf32, #tpu.memory_space<vmem>>, vector<16x64xf32>,
    } else {
    }
    return
  }
  func.func @transform_0(%arg0: i32, %arg1: i32) -> (i32, i32) {
    %c0_i32 = arith.constant 0 : i32
    %c0_i32_0 = arith.constant 0 : i32
    return %arg0, %c0_i32 : i32, i32
  }
  func.func @transform_1(%arg0: i32, %arg1: i32) -> (i32, i32) {
    %c0_i32 = arith.constant 0 : i32
    %c0_i32_0 = arith.constant 0 : i32
    return %arg1, %c0_i32 : i32, i32
  }
  func.func @transform_2(%arg0: i32, %arg1: i32) -> (i32, i32) {
    %c0_i32 = arith.constant 0 : i32
    return %arg0, %arg1 : i32, i32
  }
  func.func @transform_3(%arg0: i32, %arg1: i32) -> (i32, i32) {
    %c0_i32 = arith.constant 0 : i32
    %c0_i32_0 = arith.constant 0 : i32
    %c0_i32_1 = arith.constant 0 : i32
    return %c0_i32, %c0_i32_0 : i32, i32
  }
  func.func @transform_4(%arg0: i32, %arg1: i32) -> (i32, i32) {
    %c0_i32 = arith.constant 0 : i32
    %c0_i32_0 = arith.constant 0 : i32
    %c0_i32_1 = arith.constant 0 : i32
    return %c0_i32, %c0_i32_0 : i32, i32
  }
  func.func @transform_5(%arg0: i32, %arg1: i32) -> (i32, i32) {
    %c0_i32 = arith.constant 0 : i32
    %c0_i32_0 = arith.constant 0 : i32
    %c0_i32_1 = arith.constant 0 : i32
    return %c0_i32, %c0_i32_0 : i32, i32
  }
  func.func @transform_6(%arg0: i32, %arg1: i32) -> (i32, i32) {
    %c0_i32 = arith.constant 0 : i32
    %c0_i32_0 = arith.constant 0 : i32
    %c0_i32_1 = arith.constant 0 : i32
    return %c0_i32, %c0_i32_0 : i32, i32
  }
  func.func @transform_7(%arg0: i32, %arg1: i32) -> (i32, i32) {
    %c0_i32 = arith.constant 0 : i32
    %c0_i32_0 = arith.constant 0 : i32
    return %arg0, %c0_i32 : i32, i32
  }
}

</mosaic_0001>

<llo_original>
// kernel: tpu_custom_call.1
$region0: #{tpu_custom_call.1}
  #allocation0 [shape = 'u32[]', space=smem, size = 0x4, offset = 0x4, fixed_abs, tag = 'smem constant byte address 0x4 - core index']
  #allocation1 [shape = 'u32[144,128]{1,0:T(1,128)}', space=vmem, size = 0x12000, scoped, tag = 'internal scratch']
  #allocation2 [shape = 'f32[2,16,32]{2,1,0:T(8,128)}', space=vmem, size = 0x4000, scoped, tag = 'scratch operand']
  #allocation3 [shape = 'f32[2,16,32]{2,1,0:T(8,128)}', space=vmem, size = 0x4000, scoped, tag = 'scratch operand']
  #allocation4 [shape = 'f32[2,16,1]{2,1,0:T(8,128)}', space=vmem, size = 0x4000, scoped, tag = 'scratch operand']
  #allocation5 [shape = 'f32[2,16,1]{2,1,0:T(8,128)}', space=vmem, size = 0x4000, scoped, tag = 'scratch operand']
  #allocation6 [shape = 'f32[2,16,32]{2,1,0:T(8,128)}', space=vmem, size = 0x4000, scoped, tag = 'scratch operand']
  %s0 = inlined_call_operand.vmem [shape: f32[16,8], index: 0, kind: input, shape index: {}]
  %s1 = inlined_call_operand.vmem [shape: f32[16,8], index: 1, kind: input, shape index: {}]
  %s2 = inlined_call_operand.vmem [shape: s8[16,16], index: 2, kind: input, shape index: {}]
  %s3 = inlined_call_operand.vmem [shape: f32[8,128], index: 3, kind: input, shape index: {}]
  %s4 = inlined_call_operand.vmem [shape: f32[1,128], index: 4, kind: input, shape index: {}]
  %s5 = inlined_call_operand.vmem [shape: f32[8,128], index: 5, kind: input, shape index: {}]
  %s6 = inlined_call_operand.vmem [shape: f32[1,128], index: 6, kind: input, shape index: {}]
  %s7 = inlined_call_operand.hbm [shape: f32[16,64], index: 7, kind: output, shape index: {}]
  %s8 = sld [smem:[#allocation0]]
  $region46: #{tpu_custom_call.1} parent=0
    _
  %s10 = ssub.s32 1, %s8
  %s11 = scalar_select 0, %s10, %s8
  $region1: #{tpu_custom_call.1} parent=0
    #allocation7 [shape = 'u8[8192]{0}', space=vmem, size = 0x2000, scoped, tag = 'output window, operand 0, single buffered']
    #allocation8 [shape = 's32[1]{0}', space=sflag, size = 0x4, scoped, tag = 'scoped memory for tpu_custom_call.1']
    %12 = vsyncpa [#allocation8], 0
    // Predicated region
    $region2: #{tpu_custom_call.1} parent=1 // pred_check
      _
    $region3: #{tpu_custom_call.1} parent=1 // pred_check_branch
      %14 = sbr.rel (0) target = $region5
    $region4: #{tpu_custom_call.1} parent=1 // pred_region
      _
    $region5: #{tpu_custom_call.1} parent=1 // pred_fallthru
      _
    // Predicated region
    $region6: #{tpu_custom_call.1} parent=1 // pred_check
      _
    $region7: #{tpu_custom_call.1} parent=1 // pred_check_branch
      %16 = sbr.rel (0) target = $region9
    $region8: #{tpu_custom_call.1} parent=1 // pred_region
      _
    $region9: #{tpu_custom_call.1} parent=1 // pred_fallthru
      _
    // Predicated region
    $region10: #{tpu_custom_call.1} parent=1 // pred_check
      _
    $region11: #{tpu_custom_call.1} parent=1 // pred_check_branch
      %18 = sbr.rel (0) target = $region13
    $region12: #{tpu_custom_call.1} parent=1 // pred_region
      _
    $region13: #{tpu_custom_call.1} parent=1 // pred_fallthru
      _
    // Predicated region
    $region14: #{tpu_custom_call.1} parent=1 // pred_check
      _
    $region15: #{tpu_custom_call.1} parent=1 // pred_check_branch
      %20 = sbr.rel (0) target = $region17
    $region16: #{tpu_custom_call.1} parent=1 // pred_region
      _
    $region17: #{tpu_custom_call.1} parent=1 // pred_fallthru
      _
    // Predicated region
    $region18: #{tpu_custom_call.1} parent=1 // pred_check
      _
    $region19: #{tpu_custom_call.1} parent=1 // pred_check_branch
      %22 = sbr.rel (0) target = $region21
    $region20: #{tpu_custom_call.1} parent=1 // pred_region
      _
    $region21: #{tpu_custom_call.1} parent=1 // pred_fallthru
      _
    // Predicated region
    $region22: #{tpu_custom_call.1} parent=1 // pred_check
      _
    $region23: #{tpu_custom_call.1} parent=1 // pred_check_branch
      %24 = sbr.rel (0) target = $region25
    $region24: #{tpu_custom_call.1} parent=1 // pred_region
      _
    $region25: #{tpu_custom_call.1} parent=1 // pred_fallthru
      _
    // Predicated region
    $region26: #{tpu_custom_call.1} parent=1 // pred_check
      _
    $region27: #{tpu_custom_call.1} parent=1 // pred_check_branch
      %26 = sbr.rel (0) target = $region29
    $region28: #{tpu_custom_call.1} parent=1 // pred_region
      _
    $region29: #{tpu_custom_call.1} parent=1 // pred_fallthru
      _
    %p29 = scmp.eq.s32.totalorder 0, 0
    // Predicated region
    $region30: #{tpu_custom_call.1} parent=1 // pred_check
      %p30 = pneg %p29
    $region31: #{tpu_custom_call.1} parent=1 // pred_check_branch
      %32 = sbr.rel (%p30) target = $region33
    $region32: #{tpu_custom_call.1} parent=1 // pred_region
      %v33 = vld [vmem:[%s0] sm:$0xff]
      %v34 = vld [vmem:[%s0 + $0x8] sm:$0xff]
      %v35 = vld [vmem:[%s3] sm:$0xff]
      %v36 = vld [vmem:[%s4] sm:$0x1]
      %v38 = vlaneseq
      %v39 = vshrl.u32 %v38, 7
      %v40 = vsub.s32 0, %v39
      %v41 = vrot.slane %v36, %v40
      %vm43 = vcmask 64512
      %v45 = vsel %vm43, %v33, 0
      %v48 = vsel %vm43, %v34, 0
      %50 = vmatprep.subr.mxu0 0.0
      %51 = vmatpush1.msra.mxu0 %v35
      %52 = vmatprep.subr.mxu0 0.0
      %53 = vmatpush1.msra.mxu0 0.0
      %54 = vmatprep.subr.mxu0 0.0
      %55 = vmatpush1.msra.mxu0 0.0
      %56 = vmatprep.subr.mxu0 0.0
      %57 = vmatpush1.msra.mxu0 0.0
      %58 = vmatprep.subr.mxu0 0.0
      %59 = vmatpush1.msra.mxu0 0.0
      %60 = vmatprep.subr.mxu0 0.0
      %61 = vmatpush1.msra.mxu0 0.0
      %62 = vmatprep.subr.mxu0 0.0
      %63 = vmatpush1.msra.mxu0 0.0
      %64 = vmatprep.subr.mxu0 0.0
      %65 = vmatpush1.msra.mxu0 0.0
      %66 = vmatprep.subr.mxu0 0.0
      %67 = vmatpush1.msra.mxu0 0.0
      %68 = vmatprep.subr.mxu0 0.0
      %69 = vmatpush1.msra.mxu0 0.0
      %70 = vmatprep.subr.mxu0 0.0
      %71 = vmatpush1.msra.mxu0 0.0
      %72 = vmatprep.subr.mxu0 0.0
      %73 = vmatpush1.msra.mxu0 0.0
      %74 = vmatprep.subr.mxu0 0.0
      %75 = vmatpush1.msra.mxu0 0.0
      %76 = vmatprep.subr.mxu0 0.0
      %77 = vmatpush1.msra.mxu0 0.0
      %78 = vmatprep.subr.mxu0 0.0
      %79 = vmatpush1.msra.mxu0 0.0
      %80 = vmatprep.subr.mxu0 0.0
      %81 = vmatpush1.msra.mxu0 0.0
      %82 = vmatprep.subr.mxu0 0.0
      %83 = vmatpush1.msra.mxu0 0.0
      %84 = vmatprep.subr.mxu0 0.0
      %85 = vmatpush1.msra.mxu0 0.0
      %86 = vmatprep.subr.mxu0 0.0
      %87 = vmatpush1.msra.mxu0 0.0
      %88 = vmatprep.subr.mxu0 0.0
      %89 = vmatpush1.msra.mxu0 0.0
      %90 = vmatprep.subr.mxu0 0.0
      %91 = vmatpush1.msra.mxu0 0.0
      %92 = vmatprep.subr.mxu0 0.0
      %93 = vmatpush1.msra.mxu0 0.0
      %94 = vmatprep.subr.mxu0 0.0
      %95 = vmatpush1.msra.mxu0 0.0
      %96 = vmatprep.subr.mxu0 0.0
      %97 = vmatpush1.msra.mxu0 0.0
      %98 = vmatprep.subr.mxu0 0.0
      %99 = vmatpush1.msra.mxu0 0.0
      %100 = vmatprep.subr.mxu0 0.0
      %101 = vmatpush1.msra.mxu0 0.0
      %102 = vmatprep.subr.mxu0 0.0
      %103 = vmatpush1.msra.mxu0 0.0
      %104 = vmatprep.subr.mxu0 0.0
      %105 = vmatpush1.msra.mxu0 0.0
      %106 = vmatprep.subr.mxu0 0.0
      %107 = vmatpush1.msra.mxu0 0.0
      %108 = vmatprep.subr.mxu0 0.0
      %109 = vmatpush1.msra.mxu0 0.0
      %110 = vmatprep.subr.mxu0 0.0
      %111 = vmatpush1.msra.mxu0 0.0
      %112 = vmatprep.subr.mxu0 0.0
      %113 = vmatpush1.msra.mxu0 0.0
      %114 = vmatprep.mubr.f32.mxu0 0.0
      %115 = vmatmul.mubr.f32.gmra.mrb[0].mxu0 %v45
      %v116 = vpop.f32.mrb[0].mxu0
      %v117 = vadd.f32 %v41, %v116
      %v118 = vpop.f32.mrb[0].mxu0
      %119 = vmatprep.mubr.f32.mxu0 0.0
      %120 = vmatmul.mubr.f32.gmra.mrb[0].mxu0 %v48
      %v121 = vpop.f32.mrb[0].mxu0
      %v122 = vadd.f32 %v41, %v121
      %v123 = vpop.f32.mrb[0].mxu0
      %124 = vdwg.mxu0
      %v125 = vmul.f32 %v117, 0.17677669
      %v126 = vmul.f32 %v122, 0.17677669
      %vm127 = vcmask 261120
      %128 = vst.msk [vmem:[#allocation2] sm:$0xff] %vm127, %v125
      %129 = vst.msk [vmem:[#allocation2 + $0x8] sm:$0xff] %vm127, %v126
      %132 = vrot.lane.b32.xlu0 %v117, 64
      %v133 = vpop.permute.xlu0 %132
      %134 = vrot.lane.b32.xlu0 %v122, 64
      %v135 = vpop.permute.xlu0 %134
      %138 = vst.msk [vmem:[#allocation3] sm:$0xff] %vm127, %v133
      %139 = vst.msk [vmem:[#allocation3 + $0x8] sm:$0xff] %vm127, %v135
      %142 = vrot.lane.b32.xlu0 %v125, 96
      %v143 = vpop.permute.xlu0 %142
      %144 = vrot.lane.b32.xlu0 %v126, 96
      %v145 = vpop.permute.xlu0 %144
      %s148 = scalar_lea.vmem [#allocation2], 16
      %149 = vst.msk [vmem:[%s148] sm:$0xff] %vm127, %v143
      %150 = vst.msk [vmem:[%s148 + $0x8] sm:$0xff] %vm127, %v145
      %151 = vrot.lane.b32.xlu0 %v117, 32
      %v152 = vpop.permute.xlu0 %151
      %153 = vrot.lane.b32.xlu0 %v122, 32
      %v154 = vpop.permute.xlu0 %153
      %s157 = scalar_lea.vmem [#allocation3], 16
      %158 = vst.msk [vmem:[%s157] sm:$0xff] %vm127, %v152
      %159 = vst.msk [vmem:[%s157 + $0x8] sm:$0xff] %vm127, %v154
      %vm160 = vcmask 7168
      %161 = vst.msk [vmem:[#allocation4] sm:$0xff] %vm160, -inf
      %162 = vst.msk [vmem:[#allocation4 + $0x8] sm:$0xff] %vm160, -inf
      %163 = vst.msk [vmem:[#allocation4 + $0x10] sm:$0xff] %vm160, -inf
      %164 = vst.msk [vmem:[#allocation4 + $0x18] sm:$0xff] %vm160, -inf
      %165 = vst.msk [vmem:[#allocation5] sm:$0xff] %vm160, 0.0
      %166 = vst.msk [vmem:[#allocation5 + $0x8] sm:$0xff] %vm160, 0.0
      %167 = vst.msk [vmem:[#allocation5 + $0x10] sm:$0xff] %vm160, 0.0
      %168 = vst.msk [vmem:[#allocation5 + $0x18] sm:$0xff] %vm160, 0.0
      %169 = vst.msk [vmem:[#allocation6] sm:$0xff] %vm127, 0.0
      %170 = vst.msk [vmem:[#allocation6 + $0x8] sm:$0xff] %vm127, 0.0
      %171 = vst.msk [vmem:[#allocation6 + $0x10] sm:$0xff] %vm127, 0.0
      %172 = vst.msk [vmem:[#allocation6 + $0x18] sm:$0xff] %vm127, 0.0
    $region33: #{tpu_custom_call.1} parent=1 // pred_fallthru
      _
    %v173 = vld [vmem:[%s1] sm:$0xff]
    %v174 = vld [vmem:[%s1 + $0x8] sm:$0xff]
    %v175 = vld [vmem:[%s5] sm:$0xff]
    %v176 = vld [vmem:[%s6] sm:$0x1]
    %v178 = vlaneseq
    %v179 = vshrl.u32 %v178, 7
    %v180 = vsub.s32 0, %v179
    %v181 = vrot.slane %v176, %v180
    %vm183 = vcmask 64512
    %v185 = vsel %vm183, %v173, 0
    %v188 = vsel %vm183, %v174, 0
    %190 = vmatprep.subr.mxu0 0.0
    %191 = vmatpush1.msra.mxu0 %v175
    %192 = vmatprep.subr.mxu0 0.0
    %193 = vmatpush1.msra.mxu0 0.0
    %194 = vmatprep.subr.mxu0 0.0
    %195 = vmatpush1.msra.mxu0 0.0
    %196 = vmatprep.subr.mxu0 0.0
    %197 = vmatpush1.msra.mxu0 0.0
    %198 = vmatprep.subr.mxu0 0.0
    %199 = vmatpush1.msra.mxu0 0.0
    %200 = vmatprep.subr.mxu0 0.0
    %201 = vmatpush1.msra.mxu0 0.0
    %202 = vmatprep.subr.mxu0 0.0
    %203 = vmatpush1.msra.mxu0 0.0
    %204 = vmatprep.subr.mxu0 0.0
    %205 = vmatpush1.msra.mxu0 0.0
    %206 = vmatprep.subr.mxu0 0.0
    %207 = vmatpush1.msra.mxu0 0.0
    %208 = vmatprep.subr.mxu0 0.0
    %209 = vmatpush1.msra.mxu0 0.0
    %210 = vmatprep.subr.mxu0 0.0
    %211 = vmatpush1.msra.mxu0 0.0
    %212 = vmatprep.subr.mxu0 0.0
    %213 = vmatpush1.msra.mxu0 0.0
    %214 = vmatprep.subr.mxu0 0.0
    %215 = vmatpush1.msra.mxu0 0.0
    %216 = vmatprep.subr.mxu0 0.0
    %217 = vmatpush1.msra.mxu0 0.0
    %218 = vmatprep.subr.mxu0 0.0
    %219 = vmatpush1.msra.mxu0 0.0
    %220 = vmatprep.subr.mxu0 0.0
    %221 = vmatpush1.msra.mxu0 0.0
    %222 = vmatprep.subr.mxu0 0.0
    %223 = vmatpush1.msra.mxu0 0.0
    %224 = vmatprep.subr.mxu0 0.0
    %225 = vmatpush1.msra.mxu0 0.0
    %226 = vmatprep.subr.mxu0 0.0
    %227 = vmatpush1.msra.mxu0 0.0
    %228 = vmatprep.subr.mxu0 0.0
    %229 = vmatpush1.msra.mxu0 0.0
    %230 = vmatprep.subr.mxu0 0.0
    %231 = vmatpush1.msra.mxu0 0.0
    %232 = vmatprep.subr.mxu0 0.0
    %233 = vmatpush1.msra.mxu0 0.0
    %234 = vmatprep.subr.mxu0 0.0
    %235 = vmatpush1.msra.mxu0 0.0
    %236 = vmatprep.subr.mxu0 0.0
    %237 = vmatpush1.msra.mxu0 0.0
    %238 = vmatprep.subr.mxu0 0.0
    %239 = vmatpush1.msra.mxu0 0.0
    %240 = vmatprep.subr.mxu0 0.0
    %241 = vmatpush1.msra.mxu0 0.0
    %242 = vmatprep.subr.mxu0 0.0
    %243 = vmatpush1.msra.mxu0 0.0
    %244 = vmatprep.subr.mxu0 0.0
    %245 = vmatpush1.msra.mxu0 0.0
    %246 = vmatprep.subr.mxu0 0.0
    %247 = vmatpush1.msra.mxu0 0.0
    %248 = vmatprep.subr.mxu0 0.0
    %249 = vmatpush1.msra.mxu0 0.0
    %250 = vmatprep.subr.mxu0 0.0
    %251 = vmatpush1.msra.mxu0 0.0
    %252 = vmatprep.subr.mxu0 0.0
    %253 = vmatpush1.msra.mxu0 0.0
    %254 = vmatprep.mubr.f32.mxu0 0.0
    %255 = vmatmul.mubr.f32.gmra.mrb[0].mxu0 %v185
    %v256 = vpop.f32.mrb[0].mxu0
    %v257 = vadd.f32 %v181, %v256
    %v258 = vpop.f32.mrb[0].mxu0
    %259 = vmatprep.mubr.f32.mxu0 0.0
    %260 = vmatmul.mubr.f32.gmra.mrb[0].mxu0 %v188
    %v261 = vpop.f32.mrb[0].mxu0
    %v262 = vadd.f32 %v181, %v261
    %v263 = vpop.f32.mrb[0].mxu0
    %264 = vdwg.mxu0
    %v265 = vld [vmem:[%s2] sm:$0x3]
    %v266 = vld [vmem:[%s2 + $0x2] sm:$0x3]
    %vm267 = vnez %v265
    %vm268 = vnez %v266
    %v269 = vld [vmem:[#allocation2] sm:$0xff]
    %v270 = vld [vmem:[#allocation2 + $0x8] sm:$0xff]
    %vm271 = vcmask 261120
    %v273 = vsel %vm271, %v269, 0
    %v276 = vsel %vm271, %v270, 0
    %v279 = vsel %vm271, %v257, 0
    %v282 = vsel %vm271, %v262, 0
    %284 = vmatprep.subr.mxu0 0.0
    %285 = vmatpush1.xpose.msra.mxu0 %v279
    %286 = vmatprep.subr.mxu0 0.0
    %287 = vmatpush1.xpose.msra.mxu0 %v282
    %288 = vmatprep.subr.mxu0 0.0
    %289 = vmatpush1.xpose.msra.mxu0 0.0
    %290 = vmatprep.subr.mxu0 0.0
    %291 = vmatpush1.xpose.msra.mxu0 0.0
    %292 = vmatprep.subr.mxu0 0.0
    %293 = vmatpush1.xpose.msra.mxu0 0.0
    %294 = vmatprep.subr.mxu0 0.0
    %295 = vmatpush1.xpose.msra.mxu0 0.0
    %296 = vmatprep.subr.mxu0 0.0
    %297 = vmatpush1.xpose.msra.mxu0 0.0
    %298 = vmatprep.subr.mxu0 0.0
    %299 = vmatpush1.xpose.msra.mxu0 0.0
    %300 = vmatprep.subr.mxu0 0.0
    %301 = vmatpush1.xpose.msra.mxu0 0.0
    %302 = vmatprep.subr.mxu0 0.0
    %303 = vmatpush1.xpose.msra.mxu0 0.0
    %304 = vmatprep.subr.mxu0 0.0
    %305 = vmatpush1.xpose.msra.mxu0 0.0
    %306 = vmatprep.subr.mxu0 0.0
    %307 = vmatpush1.xpose.msra.mxu0 0.0
    %308 = vmatprep.subr.mxu0 0.0
    %309 = vmatpush1.xpose.msra.mxu0 0.0
    %310 = vmatprep.subr.mxu0 0.0
    %311 = vmatpush1.xpose.msra.mxu0 0.0
    %312 = vmatprep.subr.mxu0 0.0
    %313 = vmatpush1.xpose.msra.mxu0 0.0
    %314 = vmatprep.subr.mxu0 0.0
    %315 = vmatpush1.xpose.msra.mxu0 0.0
    %316 = vmatprep.subr.mxu0 0.0
    %317 = vmatpush1.xpose.msra.mxu0 0.0
    %318 = vmatprep.subr.mxu0 0.0
    %319 = vmatpush1.xpose.msra.mxu0 0.0
    %320 = vmatprep.subr.mxu0 0.0
    %321 = vmatpush1.xpose.msra.mxu0 0.0
    %322 = vmatprep.subr.mxu0 0.0
    %323 = vmatpush1.xpose.msra.mxu0 0.0
    %324 = vmatprep.subr.mxu0 0.0
    %325 = vmatpush1.xpose.msra.mxu0 0.0
    %326 = vmatprep.subr.mxu0 0.0
    %327 = vmatpush1.xpose.msra.mxu0 0.0
    %328 = vmatprep.subr.mxu0 0.0
    %329 = vmatpush1.xpose.msra.mxu0 0.0
    %330 = vmatprep.subr.mxu0 0.0
    %331 = vmatpush1.xpose.msra.mxu0 0.0
    %332 = vmatprep.subr.mxu0 0.0
    %333 = vmatpush1.xpose.msra.mxu0 0.0
    %334 = vmatprep.subr.mxu0 0.0
    %335 = vmatpush1.xpose.msra.mxu0 0.0
    %336 = vmatprep.subr.mxu0 0.0
    %337 = vmatpush1.xpose.msra.mxu0 0.0
    %338 = vmatprep.subr.mxu0 0.0
    %339 = vmatpush1.xpose.msra.mxu0 0.0
    %340 = vmatprep.subr.mxu0 0.0
    %341 = vmatpush1.xpose.msra.mxu0 0.0
    %342 = vmatprep.subr.mxu0 0.0
    %343 = vmatpush1.xpose.msra.mxu0 0.0
    %344 = vmatprep.subr.mxu0 0.0
    %345 = vmatpush1.xpose.msra.mxu0 0.0
    %346 = vmatprep.subr.mxu0 0.0
    %347 = vmatpush1.xpose.msra.mxu0 0.0
    %348 = vmatprep.mubr.f32.mxu0 0.0
    %349 = vmatmul.mubr.f32.gmra.mrb[0].mxu0 %v273
    %v350 = vpop.f32.mrb[0].mxu0
    %v351 = vadd.f32 0.0, %v350
    %v352 = vpop.f32.mrb[0].mxu0
    %353 = vmatprep.mubr.f32.mxu0 0.0
    %354 = vmatmul.mubr.f32.gmra.mrb[0].mxu0 %v276
    %v355 = vpop.f32.mrb[0].mxu0
    %v356 = vadd.f32 0.0, %v355
    %v357 = vpop.f32.mrb[0].mxu0
    %358 = vdwg.mxu0
    %v359 = vsel %vm267, 16843009, 0
    %v360 = vsel %vm268, 16843009, 0
    %v361 = vunpack.c.0.s8 %v359
    %v362 = vunpack.c.0.s8 %v360
    %vm363 = vcmp.ne.s32.totalorder %v361, 0
    %vm364 = vcmp.ne.s32.totalorder %v362, 0
    %v365 = vsel %vm363, %v351, -9e+15
    %v366 = vsel %vm364, %v356, -9e+15
    %v367 = vld [vmem:[#allocation4] sm:$0xff]
    %v368 = vld [vmem:[#allocation4 + $0x8] sm:$0xff]
    %vm369 = vcmask 130048
    %v370 = vsel %vm369, %v365, -inf
    %371 = vmax.xlane.f32.xlu0 %v370
    %v372 = vpop.xlane.xlu0 %371
    %v373 = vsel %vm369, %v366, -inf
    %374 = vmax.xlane.f32.xlu0 %v373
    %v375 = vpop.xlane.xlu0 %374
    %v376 = vmax.f32 %v367, %v372
    %v377 = vmax.f32 %v368, %v375
    %v378 = vsub.f32 %v367, %v376
    %v379 = vsub.f32 %v368, %v377
    %v380 = vmul.f32 %v378, 1.442695
    %v381 = vpow.pop %v380
    %v382 = vmul.f32 %v379, 1.442695
    %v383 = vpow.pop %v382
    %385 = vset.pattern.permute.xlu0 0
    %386 = vperm.xlu0 %385, %v376
    %v387 = vpop.permute.xlu0 %386
    %390 = vset.pattern.permute.xlu0 0
    %391 = vperm.xlu0 %390, %v377
    %v392 = vpop.permute.xlu0 %391
    %v394 = vsub.f32 %v365, %v387
    %v395 = vsub.f32 %v366, %v392
    %v396 = vmul.f32 %v394, 1.442695
    %v397 = vpow.pop %v396
    %v398 = vmul.f32 %v395, 1.442695
    %v399 = vpow.pop %v398
    %v400 = vld [vmem:[#allocation5] sm:$0xff]
    %v401 = vld [vmem:[#allocation5 + $0x8] sm:$0xff]
    %v402 = vmul.f32 %v381, %v400
    %v403 = vmul.f32 %v383, %v401
    %v404 = vsel %vm369, %v397, 0.0
    %405 = vadd.xlane.f32.xlu0 %v404
    %v406 = vpop.xlane.xlu0 %405
    %v407 = vsel %vm369, %v399, 0.0
    %408 = vadd.xlane.f32.xlu0 %v407
    %v409 = vpop.xlane.xlu0 %408
    %v410 = vadd.f32 %v402, %v406
    %v411 = vadd.f32 %v403, %v409
    %vm412 = vcmask 7168
    %413 = vst.msk [vmem:[#allocation5] sm:$0xff] %vm412, %v410
    %414 = vst.msk [vmem:[#allocation5 + $0x8] sm:$0xff] %vm412, %v411
    %v415 = vld [vmem:[#allocation6] sm:$0xff]
    %v416 = vld [vmem:[#allocation6 + $0x8] sm:$0xff]
    %418 = vset.pattern.permute.xlu0 0
    %419 = vperm.xlu0 %418, %v381
    %v420 = vpop.permute.xlu0 %419
    %423 = vset.pattern.permute.xlu0 0
    %424 = vperm.xlu0 %423, %v383
    %v425 = vpop.permute.xlu0 %424
    %v427 = vmul.f32 %v420, %v415
    %v428 = vmul.f32 %v425, %v416
    %429 = vrot.lane.b32.xlu0 %v257, 64
    %v430 = vpop.permute.xlu0 %429
    %431 = vrot.lane.b32.xlu0 %v262, 64
    %v432 = vpop.permute.xlu0 %431
    %v436 = vsel %vm369, %v397, 0
    %v439 = vsel %vm369, %v399, 0
    %441 = vmatprep.subr.mxu0 0.0
    %442 = vmatpush1.msra.mxu0 %v430
    %443 = vmatprep.subr.mxu0 0.0
    %444 = vmatpush1.msra.mxu0 %v432
    %445 = vmatprep.subr.mxu0 0.0
    %446 = vmatpush1.msra.mxu0 0.0
    %447 = vmatprep.subr.mxu0 0.0
    %448 = vmatpush1.msra.mxu0 0.0
    %449 = vmatprep.subr.mxu0 0.0
    %450 = vmatpush1.msra.mxu0 0.0
    %451 = vmatprep.subr.mxu0 0.0
    %452 = vmatpush1.msra.mxu0 0.0
    %453 = vmatprep.subr.mxu0 0.0
    %454 = vmatpush1.msra.mxu0 0.0
    %455 = vmatprep.subr.mxu0 0.0
    %456 = vmatpush1.msra.mxu0 0.0
    %457 = vmatprep.subr.mxu0 0.0
    %458 = vmatpush1.msra.mxu0 0.0
    %459 = vmatprep.subr.mxu0 0.0
    %460 = vmatpush1.msra.mxu0 0.0
    %461 = vmatprep.subr.mxu0 0.0
    %462 = vmatpush1.msra.mxu0 0.0
    %463 = vmatprep.subr.mxu0 0.0
    %464 = vmatpush1.msra.mxu0 0.0
    %465 = vmatprep.subr.mxu0 0.0
    %466 = vmatpush1.msra.mxu0 0.0
    %467 = vmatprep.subr.mxu0 0.0
    %468 = vmatpush1.msra.mxu0 0.0
    %469 = vmatprep.subr.mxu0 0.0
    %470 = vmatpush1.msra.mxu0 0.0
    %471 = vmatprep.subr.mxu0 0.0
    %472 = vmatpush1.msra.mxu0 0.0
    %473 = vmatprep.subr.mxu0 0.0
    %474 = vmatpush1.msra.mxu0 0.0
    %475 = vmatprep.subr.mxu0 0.0
    %476 = vmatpush1.msra.mxu0 0.0
    %477 = vmatprep.subr.mxu0 0.0
    %478 = vmatpush1.msra.mxu0 0.0
    %479 = vmatprep.subr.mxu0 0.0
    %480 = vmatpush1.msra.mxu0 0.0
    %481 = vmatprep.subr.mxu0 0.0
    %482 = vmatpush1.msra.mxu0 0.0
    %483 = vmatprep.subr.mxu0 0.0
    %484 = vmatpush1.msra.mxu0 0.0
    %485 = vmatprep.subr.mxu0 0.0
    %486 = vmatpush1.msra.mxu0 0.0
    %487 = vmatprep.subr.mxu0 0.0
    %488 = vmatpush1.msra.mxu0 0.0
    %489 = vmatprep.subr.mxu0 0.0
    %490 = vmatpush1.msra.mxu0 0.0
    %491 = vmatprep.subr.mxu0 0.0
    %492 = vmatpush1.msra.mxu0 0.0
    %493 = vmatprep.subr.mxu0 0.0
    %494 = vmatpush1.msra.mxu0 0.0
    %495 = vmatprep.subr.mxu0 0.0
    %496 = vmatpush1.msra.mxu0 0.0
    %497 = vmatprep.subr.mxu0 0.0
    %498 = vmatpush1.msra.mxu0 0.0
    %499 = vmatprep.subr.mxu0 0.0
    %500 = vmatpush1.msra.mxu0 0.0
    %501 = vmatprep.subr.mxu0 0.0
    %502 = vmatpush1.msra.mxu0 0.0
    %503 = vmatprep.subr.mxu0 0.0
    %504 = vmatpush1.msra.mxu0 0.0
    %505 = vmatprep.mubr.f32.mxu0 0.0
    %506 = vmatmul.mubr.f32.gmra.mrb[0].mxu0 %v436
    %v507 = vpop.f32.mrb[0].mxu0
    %v508 = vadd.f32 0.0, %v507
    %v509 = vpop.f32.mrb[0].mxu0
    %510 = vmatprep.mubr.f32.mxu0 0.0
    %511 = vmatmul.mubr.f32.gmra.mrb[0].mxu0 %v439
    %v512 = vpop.f32.mrb[0].mxu0
    %v513 = vadd.f32 0.0, %v512
    %v514 = vpop.f32.mrb[0].mxu0
    %515 = vdwg.mxu0
    %v516 = vadd.f32 %v427, %v508
    %v517 = vadd.f32 %v428, %v513
    %518 = vst.msk [vmem:[#allocation6] sm:$0xff] %vm271, %v516
    %519 = vst.msk [vmem:[#allocation6 + $0x8] sm:$0xff] %vm271, %v517
    %520 = vst.msk [vmem:[#allocation4] sm:$0xff] %vm412, %v376
    %521 = vst.msk [vmem:[#allocation4 + $0x8] sm:$0xff] %vm412, %v377
    %s522 = scalar_lea.vmem [#allocation2], 16
    %v523 = vld [vmem:[%s522] sm:$0xff]
    %v524 = vld [vmem:[%s522 + $0x8] sm:$0xff]
    %525 = vrot.lane.b32.xlu0 %v257, 96
    %v526 = vpop.permute.xlu0 %525
    %527 = vrot.lane.b32.xlu0 %v262, 96
    %v528 = vpop.permute.xlu0 %527
    %v530 = vsel %vm271, %v523, 0
    %v533 = vsel %vm271, %v524, 0
    %v535 = vsel %vm271, %v526, 0
    %v537 = vsel %vm271, %v528, 0
    %539 = vmatprep.subr.mxu0 0.0
    %540 = vmatpush1.xpose.msra.mxu0 %v535
    %541 = vmatprep.subr.mxu0 0.0
    %542 = vmatpush1.xpose.msra.mxu0 %v537
    %543 = vmatprep.subr.mxu0 0.0
    %544 = vmatpush1.xpose.msra.mxu0 0.0
    %545 = vmatprep.subr.mxu0 0.0
    %546 = vmatpush1.xpose.msra.mxu0 0.0
    %547 = vmatprep.subr.mxu0 0.0
    %548 = vmatpush1.xpose.msra.mxu0 0.0
    %549 = vmatprep.subr.mxu0 0.0
    %550 = vmatpush1.xpose.msra.mxu0 0.0
    %551 = vmatprep.subr.mxu0 0.0
    %552 = vmatpush1.xpose.msra.mxu0 0.0
    %553 = vmatprep.subr.mxu0 0.0
    %554 = vmatpush1.xpose.msra.mxu0 0.0
    %555 = vmatprep.subr.mxu0 0.0
    %556 = vmatpush1.xpose.msra.mxu0 0.0
    %557 = vmatprep.subr.mxu0 0.0
    %558 = vmatpush1.xpose.msra.mxu0 0.0
    %559 = vmatprep.subr.mxu0 0.0
    %560 = vmatpush1.xpose.msra.mxu0 0.0
    %561 = vmatprep.subr.mxu0 0.0
    %562 = vmatpush1.xpose.msra.mxu0 0.0
    %563 = vmatprep.subr.mxu0 0.0
    %564 = vmatpush1.xpose.msra.mxu0 0.0
    %565 = vmatprep.subr.mxu0 0.0
    %566 = vmatpush1.xpose.msra.mxu0 0.0
    %567 = vmatprep.subr.mxu0 0.0
    %568 = vmatpush1.xpose.msra.mxu0 0.0
    %569 = vmatprep.subr.mxu0 0.0
    %570 = vmatpush1.xpose.msra.mxu0 0.0
    %571 = vmatprep.subr.mxu0 0.0
    %572 = vmatpush1.xpose.msra.mxu0 0.0
    %573 = vmatprep.subr.mxu0 0.0
    %574 = vmatpush1.xpose.msra.mxu0 0.0
    %575 = vmatprep.subr.mxu0 0.0
    %576 = vmatpush1.xpose.msra.mxu0 0.0
    %577 = vmatprep.subr.mxu0 0.0
    %578 = vmatpush1.xpose.msra.mxu0 0.0
    %579 = vmatprep.subr.mxu0 0.0
    %580 = vmatpush1.xpose.msra.mxu0 0.0
    %581 = vmatprep.subr.mxu0 0.0
    %582 = vmatpush1.xpose.msra.mxu0 0.0
    %583 = vmatprep.subr.mxu0 0.0
    %584 = vmatpush1.xpose.msra.mxu0 0.0
    %585 = vmatprep.subr.mxu0 0.0
    %586 = vmatpush1.xpose.msra.mxu0 0.0
    %587 = vmatprep.subr.mxu0 0.0
    %588 = vmatpush1.xpose.msra.mxu0 0.0
    %589 = vmatprep.subr.mxu0 0.0
    %590 = vmatpush1.xpose.msra.mxu0 0.0
    %591 = vmatprep.subr.mxu0 0.0
    %592 = vmatpush1.xpose.msra.mxu0 0.0
    %593 = vmatprep.subr.mxu0 0.0
    %594 = vmatpush1.xpose.msra.mxu0 0.0
    %595 = vmatprep.subr.mxu0 0.0
    %596 = vmatpush1.xpose.msra.mxu0 0.0
    %597 = vmatprep.subr.mxu0 0.0
    %598 = vmatpush1.xpose.msra.mxu0 0.0
    %599 = vmatprep.subr.mxu0 0.0
    %600 = vmatpush1.xpose.msra.mxu0 0.0
    %601 = vmatprep.subr.mxu0 0.0
    %602 = vmatpush1.xpose.msra.mxu0 0.0
    %603 = vmatprep.mubr.f32.mxu0 0.0
    %604 = vmatmul.mubr.f32.gmra.mrb[0].mxu0 %v530
    %v605 = vpop.f32.mrb[0].mxu0
    %v606 = vadd.f32 0.0, %v605
    %v607 = vpop.f32.mrb[0].mxu0
    %608 = vmatprep.mubr.f32.mxu0 0.0
    %609 = vmatmul.mubr.f32.gmra.mrb[0].mxu0 %v533
    %v610 = vpop.f32.mrb[0].mxu0
    %v611 = vadd.f32 0.0, %v610
    %v612 = vpop.f32.mrb[0].mxu0
    %613 = vdwg.mxu0
    %v614 = vsel %vm363, %v606, -9e+15
    %v615 = vsel %vm364, %v611, -9e+15
    %s616 = scalar_lea.vmem [#allocation4], 16
    %v617 = vld [vmem:[%s616] sm:$0xff]
    %v618 = vld [vmem:[%s616 + $0x8] sm:$0xff]
    %v619 = vsel %vm369, %v614, -inf
    %620 = vmax.xlane.f32.xlu0 %v619
    %v621 = vpop.xlane.xlu0 %620
    %v622 = vsel %vm369, %v615, -inf
    %623 = vmax.xlane.f32.xlu0 %v622
    %v624 = vpop.xlane.xlu0 %623
    %v625 = vmax.f32 %v617, %v621
    %v626 = vmax.f32 %v618, %v624
    %v627 = vsub.f32 %v617, %v625
    %v628 = vsub.f32 %v618, %v626
    %v629 = vmul.f32 %v627, 1.442695
    %v630 = vpow.pop %v629
    %v631 = vmul.f32 %v628, 1.442695
    %v632 = vpow.pop %v631
    %634 = vset.pattern.permute.xlu0 0
    %635 = vperm.xlu0 %634, %v625
    %v636 = vpop.permute.xlu0 %635
    %639 = vset.pattern.permute.xlu0 0
    %640 = vperm.xlu0 %639, %v626
    %v641 = vpop.permute.xlu0 %640
    %v643 = vsub.f32 %v614, %v636
    %v644 = vsub.f32 %v615, %v641
    %v645 = vmul.f32 %v643, 1.442695
    %v646 = vpow.pop %v645
    %v647 = vmul.f32 %v644, 1.442695
    %v648 = vpow.pop %v647
    %s649 = scalar_lea.vmem [#allocation5], 16
    %v650 = vld [vmem:[%s649] sm:$0xff]
    %v651 = vld [vmem:[%s649 + $0x8] sm:$0xff]
    %v652 = vmul.f32 %v630, %v650
    %v653 = vmul.f32 %v632, %v651
    %v654 = vsel %vm369, %v646, 0.0
    %655 = vadd.xlane.f32.xlu0 %v654
    %v656 = vpop.xlane.xlu0 %655
    %v657 = vsel %vm369, %v648, 0.0
    %658 = vadd.xlane.f32.xlu0 %v657
    %v659 = vpop.xlane.xlu0 %658
    %v660 = vadd.f32 %v652, %v656
    %v661 = vadd.f32 %v653, %v659
    %662 = vst.msk [vmem:[%s649] sm:$0xff] %vm412, %v660
    %663 = vst.msk [vmem:[%s649 + $0x8] sm:$0xff] %vm412, %v661
    %s664 = scalar_lea.vmem [#allocation6], 16
    %v665 = vld [vmem:[%s664] sm:$0xff]
    %v666 = vld [vmem:[%s664 + $0x8] sm:$0xff]
    %668 = vset.pattern.permute.xlu0 0
    %669 = vperm.xlu0 %668, %v630
    %v670 = vpop.permute.xlu0 %669
    %673 = vset.pattern.permute.xlu0 0
    %674 = vperm.xlu0 %673, %v632
    %v675 = vpop.permute.xlu0 %674
    %v677 = vmul.f32 %v670, %v665
    %v678 = vmul.f32 %v675, %v666
    %679 = vrot.lane.b32.xlu0 %v257, 32
    %v680 = vpop.permute.xlu0 %679
    %681 = vrot.lane.b32.xlu0 %v262, 32
    %v682 = vpop.permute.xlu0 %681
    %v686 = vsel %vm369, %v646, 0
    %v689 = vsel %vm369, %v648, 0
    %691 = vmatprep.subr.mxu0 0.0
    %692 = vmatpush1.msra.mxu0 %v680
    %693 = vmatprep.subr.mxu0 0.0
    %694 = vmatpush1.msra.mxu0 %v682
    %695 = vmatprep.subr.mxu0 0.0
    %696 = vmatpush1.msra.mxu0 0.0
    %697 = vmatprep.subr.mxu0 0.0
    %698 = vmatpush1.msra.mxu0 0.0
    %699 = vmatprep.subr.mxu0 0.0
    %700 = vmatpush1.msra.mxu0 0.0
    %701 = vmatprep.subr.mxu0 0.0
    %702 = vmatpush1.msra.mxu0 0.0
    %703 = vmatprep.subr.mxu0 0.0
    %704 = vmatpush1.msra.mxu0 0.0
    %705 = vmatprep.subr.mxu0 0.0
    %706 = vmatpush1.msra.mxu0 0.0
    %707 = vmatprep.subr.mxu0 0.0
    %708 = vmatpush1.msra.mxu0 0.0
    %709 = vmatprep.subr.mxu0 0.0
    %710 = vmatpush1.msra.mxu0 0.0
    %711 = vmatprep.subr.mxu0 0.0
    %712 = vmatpush1.msra.mxu0 0.0
    %713 = vmatprep.subr.mxu0 0.0
    %714 = vmatpush1.msra.mxu0 0.0
    %715 = vmatprep.subr.mxu0 0.0
    %716 = vmatpush1.msra.mxu0 0.0
    %717 = vmatprep.subr.mxu0 0.0
    %718 = vmatpush1.msra.mxu0 0.0
    %719 = vmatprep.subr.mxu0 0.0
    %720 = vmatpush1.msra.mxu0 0.0
    %721 = vmatprep.subr.mxu0 0.0
    %722 = vmatpush1.msra.mxu0 0.0
    %723 = vmatprep.subr.mxu0 0.0
    %724 = vmatpush1.msra.mxu0 0.0
    %725 = vmatprep.subr.mxu0 0.0
    %726 = vmatpush1.msra.mxu0 0.0
    %727 = vmatprep.subr.mxu0 0.0
    %728 = vmatpush1.msra.mxu0 0.0
    %729 = vmatprep.subr.mxu0 0.0
    %730 = vmatpush1.msra.mxu0 0.0
    %731 = vmatprep.subr.mxu0 0.0
    %732 = vmatpush1.msra.mxu0 0.0
    %733 = vmatprep.subr.mxu0 0.0
    %734 = vmatpush1.msra.mxu0 0.0
    %735 = vmatprep.subr.mxu0 0.0
    %736 = vmatpush1.msra.mxu0 0.0
    %737 = vmatprep.subr.mxu0 0.0
    %738 = vmatpush1.msra.mxu0 0.0
    %739 = vmatprep.subr.mxu0 0.0
    %740 = vmatpush1.msra.mxu0 0.0
    %741 = vmatprep.subr.mxu0 0.0
    %742 = vmatpush1.msra.mxu0 0.0
    %743 = vmatprep.subr.mxu0 0.0
    %744 = vmatpush1.msra.mxu0 0.0
    %745 = vmatprep.subr.mxu0 0.0
    %746 = vmatpush1.msra.mxu0 0.0
    %747 = vmatprep.subr.mxu0 0.0
    %748 = vmatpush1.msra.mxu0 0.0
    %749 = vmatprep.subr.mxu0 0.0
    %750 = vmatpush1.msra.mxu0 0.0
    %751 = vmatprep.subr.mxu0 0.0
    %752 = vmatpush1.msra.mxu0 0.0
    %753 = vmatprep.subr.mxu0 0.0
    %754 = vmatpush1.msra.mxu0 0.0
    %755 = vmatprep.mubr.f32.mxu0 0.0
    %756 = vmatmul.mubr.f32.gmra.mrb[0].mxu0 %v686
    %v757 = vpop.f32.mrb[0].mxu0
    %v758 = vadd.f32 0.0, %v757
    %v759 = vpop.f32.mrb[0].mxu0
    %760 = vmatprep.mubr.f32.mxu0 0.0
    %761 = vmatmul.mubr.f32.gmra.mrb[0].mxu0 %v689
    %v762 = vpop.f32.mrb[0].mxu0
    %v763 = vadd.f32 0.0, %v762
    %v764 = vpop.f32.mrb[0].mxu0
    %765 = vdwg.mxu0
    %v766 = vadd.f32 %v677, %v758
    %v767 = vadd.f32 %v678, %v763
    %768 = vst.msk [vmem:[%s664] sm:$0xff] %vm271, %v766
    %769 = vst.msk [vmem:[%s664 + $0x8] sm:$0xff] %vm271, %v767
    %770 = vst.msk [vmem:[%s616] sm:$0xff] %vm412, %v625
    %771 = vst.msk [vmem:[%s616 + $0x8] sm:$0xff] %vm412, %v626
    // Predicated region
    $region34: #{tpu_custom_call.1} parent=1 // pred_check
      %p772 = pneg %p29
    $region35: #{tpu_custom_call.1} parent=1 // pred_check_branch
      %774 = sbr.rel (%p772) target = $region37
    $region36: #{tpu_custom_call.1} parent=1 // pred_region
      %v775 = vld [vmem:[#allocation5] sm:$0xff]
      %v776 = vld [vmem:[#allocation5 + $0x8] sm:$0xff]
      %v777 = vrcp.pop %v775
      %v778 = vrcp.pop %v776
      %v779 = vld [vmem:[#allocation6] sm:$0xff]
      %v780 = vld [vmem:[#allocation6 + $0x8] sm:$0xff]
      %782 = vset.pattern.permute.xlu0 0
      %783 = vperm.xlu0 %782, %v777
      %v784 = vpop.permute.xlu0 %783
      %787 = vset.pattern.permute.xlu0 0
      %788 = vperm.xlu0 %787, %v778
      %v789 = vpop.permute.xlu0 %788
      %v791 = vmul.f32 %v779, %v784
      %v792 = vmul.f32 %v780, %v789
      %v793 = vld [vmem:[#allocation3] sm:$0xff]
      %v794 = vld [vmem:[#allocation3 + $0x8] sm:$0xff]
      %v795 = vadd.f32 %v791, %v793
      %v796 = vadd.f32 %v792, %v794
      %v797 = vld [vmem:[%s649] sm:$0xff]
      %v798 = vld [vmem:[%s649 + $0x8] sm:$0xff]
      %v799 = vrcp.pop %v797
      %v800 = vrcp.pop %v798
      %v801 = vld [vmem:[%s664] sm:$0xff]
      %v802 = vld [vmem:[%s664 + $0x8] sm:$0xff]
      %804 = vset.pattern.permute.xlu0 0
      %805 = vperm.xlu0 %804, %v799
      %v806 = vpop.permute.xlu0 %805
      %809 = vset.pattern.permute.xlu0 0
      %810 = vperm.xlu0 %809, %v800
      %v811 = vpop.permute.xlu0 %810
      %v813 = vmul.f32 %v801, %v806
      %v814 = vmul.f32 %v802, %v811
      %s815 = scalar_lea.vmem [#allocation3], 16
      %v816 = vld [vmem:[%s815] sm:$0xff]
      %v817 = vld [vmem:[%s815 + $0x8] sm:$0xff]
      %v818 = vadd.f32 %v813, %v816
      %v819 = vadd.f32 %v814, %v817
      %822 = vrot.lane.b32.xlu0 %v818, 32
      %v823 = vpop.permute.xlu0 %822
      %824 = vrot.lane.b32.xlu0 %v819, 32
      %v825 = vpop.permute.xlu0 %824
      %v828 = vsel %vm271, %v795, %v823
      %v829 = vsel %vm271, %v796, %v825
      %vm830 = vcmask 523264
      %831 = vst.msk [vmem:[#allocation7] sm:$0xff] %vm830, %v828
      %832 = vst.msk [vmem:[#allocation7 + $0x8] sm:$0xff] %vm830, %v829
    $region37: #{tpu_custom_call.1} parent=1 // pred_fallthru
      _
    // Predicated region
    $region38: #{tpu_custom_call.1} parent=1 // pred_check
      _
    $region39: #{tpu_custom_call.1} parent=1 // pred_check_branch
      %834 = sbr.rel (0) target = $region41
    $region40: #{tpu_custom_call.1} parent=1 // pred_region
      %s836 = ssub.s32 256, 256
      %837 = vsyncadd [#allocation8], %s836
      %s838 = sshll.u32 [#allocation7], 4
      %s839 = int_to_ptr.vmem [resolvable:$true] %s838
      %844 = dma.vmem_to_hbm [thread:$0]  %s839, 256, %s7, [#allocation8], 128, 128, 8
    $region41: #{tpu_custom_call.1} parent=1 // pred_fallthru
      _
    // Predicated region
    $region42: #{tpu_custom_call.1} parent=1 // pred_check
      _
    $region43: #{tpu_custom_call.1} parent=1 // pred_check_branch
      %846 = sbr.rel (0) target = $region45
    $region44: #{tpu_custom_call.1} parent=1 // pred_region
      %847 = dma.done [#allocation8], 256
    $region45: #{tpu_custom_call.1} parent=1 // pred_fallthru
      _
    %848 = vsyncpa [#allocation8], 1

</llo_original>
